<compile_context>
chip_gen: v7x
topology: tpu7x:2x2x1
jax: 0.10.0
libtpu: 0.0.40
codegen_flags: <defaults>
</compile_context>

<pallas_src>
import functools

import jax
import jax.numpy as jnp
from jax import lax
from jax.experimental import pallas as pl
from jax.experimental.pallas import tpu as pltpu


def _proxy_anchor_kernel(emb_ref, prox_ref, labels_ref,
                         pos_out_ref, neg_out_ref,
                         emb_n_ref, pos_acc_ref, neg_acc_ref,
                         *, margin: float, alpha: float,
                         num_classes: int, batch: int):
    b = pl.program_id(0)            # batch tile ("parallel")
    c = pl.program_id(1)            # class tile ("arbitrary", reduction)
    num_c = pl.num_programs(1)

    tb = emb_ref.shape[0]
    tc = prox_ref.shape[0]

    a = jnp.float32(alpha)
    m = jnp.float32(margin)
    eps_sq = jnp.float32(1e-24)     # == (1e-12)**2, matches F.normalize eps

    # --- per-batch-tile prologue: normalize embeddings once, reset accs ---
    @pl.when(c == 0)
    def _init():
        emb = emb_ref[...].astype(jnp.float32)
        inv = lax.rsqrt(jnp.maximum(
            jnp.sum(emb * emb, axis=-1, keepdims=True), eps_sq))
        emb_n_ref[...] = (emb * inv).astype(emb_n_ref.dtype)
        pos_acc_ref[...] = jnp.zeros_like(pos_acc_ref)
        neg_acc_ref[...] = jnp.zeros_like(neg_acc_ref)

    # --- normalize this proxy tile (f32 math, matmul-dtype operands) ---
    prox = prox_ref[...].astype(jnp.float32)
    pinv = lax.rsqrt(jnp.maximum(
        jnp.sum(prox * prox, axis=-1, keepdims=True), eps_sq))
    prox_n = (prox * pinv).astype(emb_n_ref.dtype)

    # cosine similarity (tb, tc): contract last dim of both -> no transpose.
    cos = lax.dot_general(emb_n_ref[...], prox_n,
                          dimension_numbers=(((1,), (1,)), ((), ())),
                          preferred_element_type=jnp.float32)

    labels = labels_ref[...]                                   # (tb, 1) int32
    col = lax.broadcasted_iota(jnp.int32, (tb, tc), 1) + c * tc
    col_valid = col < num_classes                # mask padded class columns
    is_pos = jnp.logical_and(col == labels, col_valid)
    is_neg = jnp.logical_and(jnp.logical_not(is_pos), col_valid)

    # Positive term: exactly one positive column per row -> just accumulate
    # its cosine; the exp happens once per row at finalize (B exps, not B*C).
    pos_acc_ref[...] += jnp.sum(jnp.where(is_pos, cos, 0.0),
                                axis=-1, keepdims=True)

    # Negative term: full-tile exp in f32, masked row-sum, f32 accumulation.
    neg_exp = jnp.exp(a * (cos + m))
    neg_acc_ref[...] += jnp.sum(jnp.where(is_neg, neg_exp, 0.0),
                                axis=-1, keepdims=True)

    # --- per-batch-tile epilogue: emit partial sums for this batch tile ---
    @pl.when(c == num_c - 1)
    def _finalize():
        row = lax.broadcasted_iota(jnp.int32, (tb, 1), 0) + b * tb
        row_valid = row < batch                   # mask padded batch rows
        pos_exp = jnp.where(row_valid,
                            jnp.exp(-a * (pos_acc_ref[...] - m)), 0.0)
        neg_vec = jnp.where(row_valid, neg_acc_ref[...], 0.0)
        # lane-dense (8,128) block -> full unmasked vector store.
        pos_out_ref[0] = jnp.full((8, 128), jnp.sum(pos_exp), jnp.float32)
        neg_out_ref[0] = jnp.full((8, 128), jnp.sum(neg_vec), jnp.float32)


def proxy_anchor_loss(embeddings, labels, proxies, *, margin=0.1, alpha=32.0,
                      block_b=None, block_c=None):
    """Pallas TPU implementation of ProxyAnchorLoss.forward.

    embeddings: (B, E) float (f32 or bf16 — matmul runs in the input dtype)
    labels:     (B,)   int
    proxies:    (C, E) float parameter
    returns scalar float32 loss
    """
    B, E = embeddings.shape
    C, E2 = proxies.shape
    assert E == E2, "embedding sizes must match"

    if block_b is None:
        block_b = B if B <= 256 else 128          # multiple of 8 or full dim
    if block_c is None:
        # Re-derive for VMEM budget; ~2048 is the sweet spot for bf16/E~512
        # with double-buffering, and still comfortable on v7x's 64 MiB VMEM.
        block_c = C if C <= 2048 else 2048

    nb = (B + block_b - 1) // block_b
    nc = (C + block_c - 1) // block_c

    labels2d = labels.astype(jnp.int32).reshape(B, 1)

    kernel = functools.partial(
        _proxy_anchor_kernel, margin=float(margin), alpha=float(alpha),
        num_classes=int(C), batch=int(B))

    pos_parts, neg_parts = pl.pallas_call(
        kernel,
        out_shape=(jax.ShapeDtypeStruct((nb, 8, 128), jnp.float32),
                   jax.ShapeDtypeStruct((nb, 8, 128), jnp.float32)),
        grid_spec=pltpu.PrefetchScalarGridSpec(
            num_scalar_prefetch=0,
            grid=(nb, nc),
            in_specs=[
                # embeddings: resident across the class axis
                pl.BlockSpec((block_b, E), lambda b, c: (b, 0)),
                # proxies: streamed (pipelined DMA) across the class axis
                pl.BlockSpec((block_c, E), lambda b, c: (c, 0)),
                # labels
                pl.BlockSpec((block_b, 1), lambda b, c: (b, 0)),
            ],
            out_specs=[
                pl.BlockSpec((1, 8, 128), lambda b, c: (b, 0, 0)),
                pl.BlockSpec((1, 8, 128), lambda b, c: (b, 0, 0)),
            ],
            scratch_shapes=[
                pltpu.VMEM((block_b, E), embeddings.dtype),  # normalized emb
                pltpu.VMEM((block_b, 1), jnp.float32),       # positive-cos acc
                pltpu.VMEM((block_b, 1), jnp.float32),       # negative-sum acc
            ]),
        compiler_params=pltpu.CompilerParams(
            dimension_semantics=("parallel", "arbitrary"),
            vmem_limit_bytes=48 * 1024 * 1024),
    )(embeddings, proxies, labels2d)

    pos_sum = jnp.sum(pos_parts[:, 0, 0])
    neg_sum = jnp.sum(neg_parts[:, 0, 0])
    # .mean() in the reference is a no-op on a scalar.
    return jnp.log(1.0 + pos_sum) + jnp.log(1.0 + neg_sum)


def init_proxies(key, num_classes, embedding_size):
    # nn.init.kaiming_normal_(randn(C, E), mode='fan_out'):
    # fan_out = num_classes, gain = sqrt(2) -> std = sqrt(2 / num_classes)
    std = jnp.sqrt(2.0 / num_classes)
    return std * jax.random.normal(key, (num_classes, embedding_size),
                                   dtype=jnp.float32)


def _reference_loss(embeddings, labels, proxies, margin, alpha):
    emb32 = embeddings.astype(jnp.float32)
    prox32 = proxies.astype(jnp.float32)
    emb_n = emb32 / jnp.maximum(
        jnp.linalg.norm(emb32, axis=-1, keepdims=True), 1e-12)
    prox_n = prox32 / jnp.maximum(
        jnp.linalg.norm(prox32, axis=-1, keepdims=True), 1e-12)
    cos = emb_n @ prox_n.T
    pos_mask = jax.nn.one_hot(labels, proxies.shape[0], dtype=jnp.float32) > 0
    pos_sum = jnp.sum(jnp.where(pos_mask, jnp.exp(-alpha * (cos - margin)), 0.0))
    neg_sum = jnp.sum(jnp.where(~pos_mask, jnp.exp(alpha * (cos + margin)), 0.0))
    return jnp.log(1.0 + pos_sum) + jnp.log(1.0 + neg_sum)


if __name__ == "__main__":
    margin, alpha = 0.1, 32.0
    key = jax.random.PRNGKey(0)
    k1, k2, k3, k4, k5, k6 = jax.random.split(key, 6)

    # --- small single-tile case ---
    B, E, C = 8, 32, 8
    emb = jax.random.normal(k1, (B, E), dtype=jnp.float32)
    lab = jax.random.randint(k2, (B,), 0, C, dtype=jnp.int32)
    prox = init_proxies(k3, C, E)
    loss = jax.block_until_ready(
        proxy_anchor_loss(emb, lab, prox, margin=margin, alpha=alpha))
    ref = _reference_loss(emb, lab, prox, margin, alpha)
    assert jnp.allclose(loss, ref, rtol=1e-4, atol=1e-4), (loss, ref)

    # --- multi-tile case exercising the class/batch grid + padding masks ---
    B2, E2, C2 = 12, 64, 200
    emb2 = jax.random.normal(k4, (B2, E2), dtype=jnp.float32)
    lab2 = jax.random.randint(k5, (B2,), 0, C2, dtype=jnp.int32)
    prox2 = init_proxies(k6, C2, E2)
    loss2 = jax.block_until_ready(
        proxy_anchor_loss(emb2, lab2, prox2, margin=margin, alpha=alpha,
                          block_b=8, block_c=128))
    ref2 = _reference_loss(emb2, lab2, prox2, margin, alpha)
    assert jnp.allclose(loss2, ref2, rtol=1e-4, atol=1e-4), (loss2, ref2)

    print("KERNEL_OK")
</pallas_src>

<mosaic_0001>
module attributes {stable_mosaic.version = 11 : i64} {
  func.func @_proxy_anchor_kernel(%arg0: i32, %arg1: i32, %arg2: memref<8x32xf32, #tpu.memory_space<vmem>>, %arg3: memref<8x32xf32, #tpu.memory_space<vmem>>, %arg4: memref<8x1xi32, #tpu.memory_space<vmem>>, %arg5: memref<1x8x128xf32, #tpu.memory_space<vmem>>, %arg6: memref<1x8x128xf32, #tpu.memory_space<vmem>>, %arg7: memref<8x32xf32, #tpu.memory_space<vmem>>, %arg8: memref<8x1xf32, #tpu.memory_space<vmem>>, %arg9: memref<8x1xf32, #tpu.memory_space<vmem>>) attributes {dimension_semantics = [#tpu.dimension_semantics<parallel>, #tpu.dimension_semantics<arbitrary>], iteration_bounds = array<i64: 1, 1>, scalar_prefetch = 0 : i64, scratch_operands = 3 : i64, tpu.core_type = #tpu.core_type<tc>, window_params = [{transform_indices = @transform_0, window_bounds = array<i64: 8, 32>}, {transform_indices = @transform_1, window_bounds = array<i64: 8, 32>}, {transform_indices = @transform_2, window_bounds = array<i64: 8, 1>}, {transform_indices = @transform_3, window_bounds = array<i64: 1, 8, 128>}, {transform_indices = @transform_4, window_bounds = array<i64: 1, 8, 128>}]} {
    %c0_i32 = arith.constant 0 : i32
    %0 = arith.cmpi eq, %arg1, %c0_i32 : i32
    %1 = arith.extui %0 : i1 to i32
    %cst = arith.constant 1.000000e-24 : f32
    %c0_i32_0 = arith.constant 0 : i32
    %2 = arith.cmpi ne, %1, %c0_i32_0 : i32
    scf.if %2 {
      %c0_29 = arith.constant 0 : index
      %c0_30 = arith.constant 0 : index
      %48 = vector.load %arg2[%c0_29, %c0_30] : memref<8x32xf32, #tpu.memory_space<vmem>>, vector<8x32xf32>
      %49 = arith.mulf %48, %48 : vector<8x32xf32>
      %cst_31 = arith.constant dense<0.000000e+00> : vector<8xf32>
      %50 = vector.multi_reduction <add>, %49, %cst_31 [1] : vector<8x32xf32> to vector<8xf32>
      %51 = vector.shape_cast %50 : vector<8xf32> to vector<8x1xf32>
      %52 = vector.broadcast %cst : f32 to vector<8x1xf32>
      %53 = arith.maximumf %51, %52 : vector<8x1xf32>
      %54 = math.rsqrt %53 : vector<8x1xf32>
      %55 = vector.broadcast %54 : vector<8x1xf32> to vector<8x32xf32>
      %56 = arith.mulf %48, %55 : vector<8x32xf32>
      %c0_32 = arith.constant 0 : index
      %c0_33 = arith.constant 0 : index
      %57 = vector.load %arg7[%c0_32, %c0_33] : memref<8x32xf32, #tpu.memory_space<vmem>>, vector<8x32xf32>
      tpu.vector_store %arg7[%c0_32, %c0_33], %56 {strides = array<i32>} : memref<8x32xf32, #tpu.memory_space<vmem>>, vector<8x32xf32>,
      %cst_34 = arith.constant 0.000000e+00 : f32
      %58 = vector.broadcast %cst_34 : f32 to vector<8x1xf32>
      %c0_35 = arith.constant 0 : index
      %c0_36 = arith.constant 0 : index
      %59 = vector.load %arg8[%c0_35, %c0_36] : memref<8x1xf32, #tpu.memory_space<vmem>>, vector<8x1xf32>
      tpu.vector_store %arg8[%c0_35, %c0_36], %58 {strides = array<i32>} : memref<8x1xf32, #tpu.memory_space<vmem>>, vector<8x1xf32>,
      %cst_37 = arith.constant 0.000000e+00 : f32
      %60 = vector.broadcast %cst_37 : f32 to vector<8x1xf32>
      %c0_38 = arith.constant 0 : index
      %c0_39 = arith.constant 0 : index
      %61 = vector.load %arg9[%c0_38, %c0_39] : memref<8x1xf32, #tpu.memory_space<vmem>>, vector<8x1xf32>
      tpu.vector_store %arg9[%c0_38, %c0_39], %60 {strides = array<i32>} : memref<8x1xf32, #tpu.memory_space<vmem>>, vector<8x1xf32>,
    } else {
    }
    %c0 = arith.constant 0 : index
    %c0_1 = arith.constant 0 : index
    %3 = vector.load %arg3[%c0, %c0_1] : memref<8x32xf32, #tpu.memory_space<vmem>>, vector<8x32xf32>
    %4 = arith.mulf %3, %3 : vector<8x32xf32>
    %cst_2 = arith.constant dense<0.000000e+00> : vector<8xf32>
    %5 = vector.multi_reduction <add>, %4, %cst_2 [1] : vector<8x32xf32> to vector<8xf32>
    %6 = vector.shape_cast %5 : vector<8xf32> to vector<8x1xf32>
    %cst_3 = arith.constant 1.000000e-24 : f32
    %7 = vector.broadcast %cst_3 : f32 to vector<8x1xf32>
    %8 = arith.maximumf %6, %7 : vector<8x1xf32>
    %9 = math.rsqrt %8 : vector<8x1xf32>
    %10 = vector.broadcast %9 : vector<8x1xf32> to vector<8x32xf32>
    %11 = arith.mulf %3, %10 : vector<8x32xf32>
    %c0_4 = arith.constant 0 : index
    %c0_5 = arith.constant 0 : index
    %12 = vector.load %arg7[%c0_4, %c0_5] : memref<8x32xf32, #tpu.memory_space<vmem>>, vector<8x32xf32>
    %cst_6 = arith.constant dense<0.000000e+00> : vector<8x8xf32>
    %13 = tpu.matmul %12, %11, %cst_6 {dimension_numbers = #tpu.dot_dimension_numbers<[1], [1], [0], [0], [0, 0, 1, 0], [], []>} : vector<8x32xf32>, vector<8x32xf32>, vector<8x8xf32> -> vector<8x8xf32>
    %c0_7 = arith.constant 0 : index
    %c0_8 = arith.constant 0 : index
    %14 = vector.load %arg4[%c0_7, %c0_8] : memref<8x1xi32, #tpu.memory_space<vmem>>, vector<8x1xi32>
    %15 = tpu.iota {dimensions = array<i32: 1>} : vector<8x8xi32>
    %c8_i32 = arith.constant 8 : i32
    %16 = arith.muli %arg1, %c8_i32 : i32
    %17 = vector.broadcast %16 : i32 to vector<8x8xi32>
    %18 = arith.addi %15, %17 : vector<8x8xi32>
    %c8_i32_9 = arith.constant 8 : i32
    %19 = vector.broadcast %c8_i32_9 : i32 to vector<8x8xi32>
    %20 = arith.cmpi slt, %18, %19 : vector<8x8xi32>
    %21 = vector.broadcast %14 : vector<8x1xi32> to vector<8x8xi32>
    %22 = arith.cmpi eq, %18, %21 : vector<8x8xi32>
    %23 = arith.andi %22, %20 : vector<8x8xi1>
    %cst_10 = arith.constant dense<true> : vector<8x8xi1>
    %24 = arith.xori %23, %cst_10 : vector<8x8xi1>
    %25 = arith.andi %24, %20 : vector<8x8xi1>
    %c0_11 = arith.constant 0 : index
    %c0_12 = arith.constant 0 : index
    %26 = vector.load %arg8[%c0_11, %c0_12] : memref<8x1xf32, #tpu.memory_space<vmem>>, vector<8x1xf32>
    %cst_13 = arith.constant 0.000000e+00 : f32
    %27 = vector.broadcast %cst_13 : f32 to vector<8x8xf32>
    %28 = arith.select %23, %13, %27 : vector<8x8xi1>, vector<8x8xf32>
    %cst_14 = arith.constant dense<0.000000e+00> : vector<8xf32>
    %29 = vector.multi_reduction <add>, %28, %cst_14 [1] : vector<8x8xf32> to vector<8xf32>
    %30 = vector.shape_cast %29 : vector<8xf32> to vector<8x1xf32>
    %31 = arith.addf %26, %30 : vector<8x1xf32>
    %c0_15 = arith.constant 0 : index
    %c0_16 = arith.constant 0 : index
    %32 = vector.load %arg8[%c0_15, %c0_16] : memref<8x1xf32, #tpu.memory_space<vmem>>, vector<8x1xf32>
    tpu.vector_store %arg8[%c0_15, %c0_16], %31 {strides = array<i32>} : memref<8x1xf32, #tpu.memory_space<vmem>>, vector<8x1xf32>,
    %cst_17 = arith.constant 1.000000e-01 : f32
    %33 = vector.broadcast %cst_17 : f32 to vector<8x8xf32>
    %34 = arith.addf %13, %33 : vector<8x8xf32>
    %cst_18 = arith.constant 3.200000e+01 : f32
    %35 = vector.broadcast %cst_18 : f32 to vector<8x8xf32>
    %36 = arith.mulf %35, %34 : vector<8x8xf32>
    %37 = math.exp %36 : vector<8x8xf32>
    %c0_19 = arith.constant 0 : index
    %c0_20 = arith.constant 0 : index
    %38 = vector.load %arg9[%c0_19, %c0_20] : memref<8x1xf32, #tpu.memory_space<vmem>>, vector<8x1xf32>
    %cst_21 = arith.constant 0.000000e+00 : f32
    %39 = vector.broadcast %cst_21 : f32 to vector<8x8xf32>
    %40 = arith.select %25, %37, %39 : vector<8x8xi1>, vector<8x8xf32>
    %cst_22 = arith.constant dense<0.000000e+00> : vector<8xf32>
    %41 = vector.multi_reduction <add>, %40, %cst_22 [1] : vector<8x8xf32> to vector<8xf32>
    %42 = vector.shape_cast %41 : vector<8xf32> to vector<8x1xf32>
    %43 = arith.addf %38, %42 : vector<8x1xf32>
    %c0_23 = arith.constant 0 : index
    %c0_24 = arith.constant 0 : index
    %44 = vector.load %arg9[%c0_23, %c0_24] : memref<8x1xf32, #tpu.memory_space<vmem>>, vector<8x1xf32>
    tpu.vector_store %arg9[%c0_23, %c0_24], %43 {strides = array<i32>} : memref<8x1xf32, #tpu.memory_space<vmem>>, vector<8x1xf32>,
    %c0_i32_25 = arith.constant 0 : i32
    %45 = arith.cmpi eq, %arg1, %c0_i32_25 : i32
    %46 = arith.extui %45 : i1 to i32
    %cst_26 = arith.constant 3.200000e+01 : f32
    %cst_27 = arith.constant 1.000000e-01 : f32
    %c0_i32_28 = arith.constant 0 : i32
    %47 = arith.cmpi ne, %46, %c0_i32_28 : i32
    scf.if %47 {
      %48 = tpu.iota {dimensions = array<i32: 0>} : vector<8x1xi32>
      %c8_i32_29 = arith.constant 8 : i32
      %49 = arith.muli %arg0, %c8_i32_29 : i32
      %50 = vector.broadcast %49 : i32 to vector<8x1xi32>
      %51 = arith.addi %48, %50 : vector<8x1xi32>
      %c8_i32_30 = arith.constant 8 : i32
      %52 = vector.broadcast %c8_i32_30 : i32 to vector<8x1xi32>
      %53 = arith.cmpi slt, %51, %52 : vector<8x1xi32>
      %cst_31 = arith.constant 0.000000e+00 : f32
      %54 = arith.subf %cst_31, %cst_26 : f32
      %c0_32 = arith.constant 0 : index
      %c0_33 = arith.constant 0 : index
      %55 = vector.load %arg8[%c0_32, %c0_33] : memref<8x1xf32, #tpu.memory_space<vmem>>, vector<8x1xf32>
      %56 = vector.broadcast %cst_27 : f32 to vector<8x1xf32>
      %57 = arith.subf %55, %56 : vector<8x1xf32>
      %58 = vector.broadcast %54 : f32 to vector<8x1xf32>
      %59 = arith.mulf %58, %57 : vector<8x1xf32>
      %60 = math.exp %59 : vector<8x1xf32>
      %cst_34 = arith.constant 0.000000e+00 : f32
      %61 = vector.broadcast %cst_34 : f32 to vector<8x1xf32>
      %62 = arith.select %53, %60, %61 : vector<8x1xi1>, vector<8x1xf32>
      %c0_35 = arith.constant 0 : index
      %c0_36 = arith.constant 0 : index
      %63 = vector.load %arg9[%c0_35, %c0_36] : memref<8x1xf32, #tpu.memory_space<vmem>>, vector<8x1xf32>
      %cst_37 = arith.constant 0.000000e+00 : f32
      %64 = vector.broadcast %cst_37 : f32 to vector<8x1xf32>
      %65 = arith.select %53, %63, %64 : vector<8x1xi1>, vector<8x1xf32>
      %66 = vector.shape_cast %62 : vector<8x1xf32> to vector<1x8x1xf32>
      %cst_38 = arith.constant dense<0.000000e+00> : vector<1xf32>
      %67 = vector.multi_reduction <add>, %66, %cst_38 [1, 2] : vector<1x8x1xf32> to vector<1xf32>
      %68 = vector.shape_cast %67 : vector<1xf32> to vector<1x1x1xf32>
      %69 = vector.extract %68[0, 0, 0] : f32 from vector<1x1x1xf32>
      %70 = vector.broadcast %69 : f32 to vector<8x128xf32>
      %c0_39 = arith.constant 0 : index
      %c0_40 = arith.constant 0 : index
      %c0_41 = arith.constant 0 : index
      %71 = vector.load %arg5[%c0_39, %c0_40, %c0_41] : memref<1x8x128xf32, #tpu.memory_space<vmem>>, vector<1x8x128xf32>
      %72 = vector.shape_cast %71 : vector<1x8x128xf32> to vector<8x128xf32>
      %73 = vector.shape_cast %70 : vector<8x128xf32> to vector<1x8x128xf32>
      tpu.vector_store %arg5[%c0_39, %c0_40, %c0_41], %73 {strides = array<i32>} : memref<1x8x128xf32, #tpu.memory_space<vmem>>, vector<1x8x128xf32>,
      %74 = vector.shape_cast %65 : vector<8x1xf32> to vector<1x8x1xf32>
      %cst_42 = arith.constant dense<0.000000e+00> : vector<1xf32>
      %75 = vector.multi_reduction <add>, %74, %cst_42 [1, 2] : vector<1x8x1xf32> to vector<1xf32>
      %76 = vector.shape_cast %75 : vector<1xf32> to vector<1x1x1xf32>
      %77 = vector.extract %76[0, 0, 0] : f32 from vector<1x1x1xf32>
      %78 = vector.broadcast %77 : f32 to vector<8x128xf32>
      %c0_43 = arith.constant 0 : index
      %c0_44 = arith.constant 0 : index
      %c0_45 = arith.constant 0 : index
      %79 = vector.load %arg6[%c0_43, %c0_44, %c0_45] : memref<1x8x128xf32, #tpu.memory_space<vmem>>, vector<1x8x128xf32>
      %80 = vector.shape_cast %79 : vector<1x8x128xf32> to vector<8x128xf32>
      %81 = vector.shape_cast %78 : vector<8x128xf32> to vector<1x8x128xf32>
      tpu.vector_store %arg6[%c0_43, %c0_44, %c0_45], %81 {strides = array<i32>} : memref<1x8x128xf32, #tpu.memory_space<vmem>>, vector<1x8x128xf32>,
    } else {
    }
    return
  }
  func.func @transform_0(%arg0: i32, %arg1: i32) -> (i32, i32) {
    %c0_i32 = arith.constant 0 : i32
    %c0_i32_0 = arith.constant 0 : i32
    return %arg0, %c0_i32 : i32, i32
  }
  func.func @transform_1(%arg0: i32, %arg1: i32) -> (i32, i32) {
    %c0_i32 = arith.constant 0 : i32
    %c0_i32_0 = arith.constant 0 : i32
    return %arg1, %c0_i32 : i32, i32
  }
  func.func @transform_2(%arg0: i32, %arg1: i32) -> (i32, i32) {
    %c0_i32 = arith.constant 0 : i32
    %c0_i32_0 = arith.constant 0 : i32
    return %arg0, %c0_i32 : i32, i32
  }
  func.func @transform_3(%arg0: i32, %arg1: i32) -> (i32, i32, i32) {
    %c0_i32 = arith.constant 0 : i32
    %c0_i32_0 = arith.constant 0 : i32
    %c0_i32_1 = arith.constant 0 : i32
    return %arg0, %c0_i32, %c0_i32_0 : i32, i32, i32
  }
  func.func @transform_4(%arg0: i32, %arg1: i32) -> (i32, i32, i32) {
    %c0_i32 = arith.constant 0 : i32
    %c0_i32_0 = arith.constant 0 : i32
    %c0_i32_1 = arith.constant 0 : i32
    return %arg0, %c0_i32, %c0_i32_0 : i32, i32, i32
  }
}

</mosaic_0001>

<llo_original>
// kernel: tpu_custom_call.1
$region0: #{tpu_custom_call.1}
  #allocation0 [shape = 'u32[]', space=smem, size = 0x4, offset = 0x4, fixed_abs, tag = 'smem constant byte address 0x4 - core index']
  #allocation1 [shape = 'u32[144,128]{1,0:T(1,128)}', space=vmem, size = 0x12000, scoped, tag = 'internal scratch']
  #allocation2 [shape = 'f32[8,32]{1,0:T(8,128)}', space=vmem, size = 0x1000, scoped, tag = 'scratch operand']
  #allocation3 [shape = 'f32[8,1]{1,0:T(8,128)}', space=vmem, size = 0x1000, scoped, tag = 'scratch operand']
  #allocation4 [shape = 'f32[8,1]{1,0:T(8,128)}', space=vmem, size = 0x1000, scoped, tag = 'scratch operand']
  %s0 = inlined_call_operand.vmem [shape: f32[8,32], index: 0, kind: input, shape index: {}]
  %s1 = inlined_call_operand.hbm [shape: f32[8,32], index: 1, kind: input, shape index: {}]
  %s2 = inlined_call_operand.vmem [shape: s32[8,1], index: 2, kind: input, shape index: {}]
  %s3 = inlined_call_operand.hbm [shape: f32[1,8,128], index: 3, kind: output, shape index: {0}]
  %s4 = inlined_call_operand.hbm [shape: f32[1,8,128], index: 4, kind: output, shape index: {1}]
  %5 = xla_tuple %s3, %s4
  %s6 = sld [smem:[#allocation0]]
  $region42: #{tpu_custom_call.1} parent=0
    _
  %s8 = ssub.s32 1, %s6
  %s9 = scalar_select 0, %s8, %s6
  $region1: #{tpu_custom_call.1} parent=0
    #allocation5 [shape = 'u8[4096]{0}', space=vmem, size = 0x1000, scoped, tag = 'input window, operand 1, single buffered']
    #allocation6 [shape = 's32[1]{0}', space=sflag, size = 0x4, scoped, tag = 'scoped memory for tpu_custom_call.1']
    #allocation7 [shape = 's32[1]{0}', space=sflag, size = 0x4, scoped, tag = 'scoped memory for tpu_custom_call.1']
    #allocation8 [shape = 'u8[4096]{0}', space=vmem, size = 0x1000, scoped, tag = 'output window, operand 0, single buffered']
    #allocation9 [shape = 'u8[4096]{0}', space=vmem, size = 0x1000, scoped, tag = 'output window, operand 1, single buffered']
    #allocation10 [shape = 's32[1]{0}', space=sflag, size = 0x4, scoped, tag = 'scoped memory for tpu_custom_call.1']
    %10 = vsyncpa [#allocation6], 0
    %11 = vsyncpa [#allocation7], 0
    %12 = vsyncpa [#allocation10], 0
    // Predicated region
    $region2: #{tpu_custom_call.1} parent=1 // pred_check
      _
    $region3: #{tpu_custom_call.1} parent=1 // pred_check_branch
      %14 = sbr.rel (0) target = $region5
    $region4: #{tpu_custom_call.1} parent=1 // pred_region
      _
    $region5: #{tpu_custom_call.1} parent=1 // pred_fallthru
      _
    // Predicated region
    $region6: #{tpu_custom_call.1} parent=1 // pred_check
      _
    $region7: #{tpu_custom_call.1} parent=1 // pred_check_branch
      %16 = sbr.rel (0) target = $region9
    $region8: #{tpu_custom_call.1} parent=1 // pred_region
      %s18 = ssub.s32 128, 128
      %19 = vsyncadd [#allocation6], %s18
      %s21 = sshll.u32 [#allocation5], 4
      %s22 = int_to_ptr.vmem [resolvable:$true] %s21
      %24 = dma.hbm_to_vmem [thread:$0]  %s1, 128, %s22, [#allocation6]
    $region9: #{tpu_custom_call.1} parent=1 // pred_fallthru
      _
    // Predicated region
    $region10: #{tpu_custom_call.1} parent=1 // pred_check
      _
    $region11: #{tpu_custom_call.1} parent=1 // pred_check_branch
      %26 = sbr.rel (0) target = $region13
    $region12: #{tpu_custom_call.1} parent=1 // pred_region
      _
    $region13: #{tpu_custom_call.1} parent=1 // pred_fallthru
      _
    // Predicated region
    $region14: #{tpu_custom_call.1} parent=1 // pred_check
      _
    $region15: #{tpu_custom_call.1} parent=1 // pred_check_branch
      %28 = sbr.rel (0) target = $region17
    $region16: #{tpu_custom_call.1} parent=1 // pred_region
      %29 = dma.done [#allocation6], 128
    $region17: #{tpu_custom_call.1} parent=1 // pred_fallthru
      _
    %p30 = scmp.eq.s32.totalorder 0, 0
    // Predicated region
    $region18: #{tpu_custom_call.1} parent=1 // pred_check
      %p31 = pneg %p30
    $region19: #{tpu_custom_call.1} parent=1 // pred_check_branch
      %33 = sbr.rel (%p31) target = $region21
    $region20: #{tpu_custom_call.1} parent=1 // pred_region
      %v34 = vld [vmem:[%s0] sm:$0xff]
      %v35 = vmul.f32 %v34, %v34
      %vm36 = vcmask 261120
      %v37 = vsel %vm36, %v35, 0.0
      %38 = vadd.xlane.f32.xlu0 %v37
      %v39 = vpop.xlane.xlu0 %38
      %v40 = vmax.f32 %v39, 1e-24
      %v41 = vrsqrt.pop %v40
      %v42 = vmul.f32 %v34, %v41
      %43 = vst.msk [vmem:[#allocation2] sm:$0xff] %vm36, %v42
      %vm44 = vcmask 7168
      %45 = vst.msk [vmem:[#allocation3] sm:$0xff] %vm44, 0.0
      %46 = vst.msk [vmem:[#allocation4] sm:$0xff] %vm44, 0.0
    $region21: #{tpu_custom_call.1} parent=1 // pred_fallthru
      _
    %v47 = vld [vmem:[#allocation5] sm:$0xff]
    %v48 = vmul.f32 %v47, %v47
    %vm49 = vcmask 261120
    %v50 = vsel %vm49, %v48, 0.0
    %51 = vadd.xlane.f32.xlu0 %v50
    %v52 = vpop.xlane.xlu0 %51
    %v53 = vmax.f32 %v52, 1e-24
    %v54 = vrsqrt.pop %v53
    %v55 = vmul.f32 %v47, %v54
    %v56 = vld [vmem:[#allocation2] sm:$0xff]
    %v58 = vsel %vm49, %v56, 0
    %v61 = vsel %vm49, %v55, 0
    %63 = vmatprep.subr.mxu0 0.0
    %64 = vmatpush1.xpose.msra.mxu0 %v61
    %65 = vmatprep.subr.mxu0 0.0
    %66 = vmatpush1.xpose.msra.mxu0 0.0
    %67 = vmatprep.subr.mxu0 0.0
    %68 = vmatpush1.xpose.msra.mxu0 0.0
    %69 = vmatprep.subr.mxu0 0.0
    %70 = vmatpush1.xpose.msra.mxu0 0.0
    %71 = vmatprep.subr.mxu0 0.0
    %72 = vmatpush1.xpose.msra.mxu0 0.0
    %73 = vmatprep.subr.mxu0 0.0
    %74 = vmatpush1.xpose.msra.mxu0 0.0
    %75 = vmatprep.subr.mxu0 0.0
    %76 = vmatpush1.xpose.msra.mxu0 0.0
    %77 = vmatprep.subr.mxu0 0.0
    %78 = vmatpush1.xpose.msra.mxu0 0.0
    %79 = vmatprep.subr.mxu0 0.0
    %80 = vmatpush1.xpose.msra.mxu0 0.0
    %81 = vmatprep.subr.mxu0 0.0
    %82 = vmatpush1.xpose.msra.mxu0 0.0
    %83 = vmatprep.subr.mxu0 0.0
    %84 = vmatpush1.xpose.msra.mxu0 0.0
    %85 = vmatprep.subr.mxu0 0.0
    %86 = vmatpush1.xpose.msra.mxu0 0.0
    %87 = vmatprep.subr.mxu0 0.0
    %88 = vmatpush1.xpose.msra.mxu0 0.0
    %89 = vmatprep.subr.mxu0 0.0
    %90 = vmatpush1.xpose.msra.mxu0 0.0
    %91 = vmatprep.subr.mxu0 0.0
    %92 = vmatpush1.xpose.msra.mxu0 0.0
    %93 = vmatprep.subr.mxu0 0.0
    %94 = vmatpush1.xpose.msra.mxu0 0.0
    %95 = vmatprep.subr.mxu0 0.0
    %96 = vmatpush1.xpose.msra.mxu0 0.0
    %97 = vmatprep.subr.mxu0 0.0
    %98 = vmatpush1.xpose.msra.mxu0 0.0
    %99 = vmatprep.subr.mxu0 0.0
    %100 = vmatpush1.xpose.msra.mxu0 0.0
    %101 = vmatprep.subr.mxu0 0.0
    %102 = vmatpush1.xpose.msra.mxu0 0.0
    %103 = vmatprep.subr.mxu0 0.0
    %104 = vmatpush1.xpose.msra.mxu0 0.0
    %105 = vmatprep.subr.mxu0 0.0
    %106 = vmatpush1.xpose.msra.mxu0 0.0
    %107 = vmatprep.subr.mxu0 0.0
    %108 = vmatpush1.xpose.msra.mxu0 0.0
    %109 = vmatprep.subr.mxu0 0.0
    %110 = vmatpush1.xpose.msra.mxu0 0.0
    %111 = vmatprep.subr.mxu0 0.0
    %112 = vmatpush1.xpose.msra.mxu0 0.0
    %113 = vmatprep.subr.mxu0 0.0
    %114 = vmatpush1.xpose.msra.mxu0 0.0
    %115 = vmatprep.subr.mxu0 0.0
    %116 = vmatpush1.xpose.msra.mxu0 0.0
    %117 = vmatprep.subr.mxu0 0.0
    %118 = vmatpush1.xpose.msra.mxu0 0.0
    %119 = vmatprep.subr.mxu0 0.0
    %120 = vmatpush1.xpose.msra.mxu0 0.0
    %121 = vmatprep.subr.mxu0 0.0
    %122 = vmatpush1.xpose.msra.mxu0 0.0
    %123 = vmatprep.subr.mxu0 0.0
    %124 = vmatpush1.xpose.msra.mxu0 0.0
    %125 = vmatprep.subr.mxu0 0.0
    %126 = vmatpush1.xpose.msra.mxu0 0.0
    %127 = vmatprep.mubr.f32.mxu0 0.0
    %128 = vmatmul.mubr.f32.gmra.mrb[0].mxu0 %v58
    %v129 = vpop.f32.mrb[0].mxu0
    %v130 = vadd.f32 0.0, %v129
    %v131 = vpop.f32.mrb[0].mxu0
    %132 = vdwg.mxu0
    %v133 = vld [vmem:[%s2] sm:$0xff]
    %v134 = vlaneseq
    %v135 = vand.u32 %v134, 127
    %s136 = smul.u32 0, 8
    %v137 = vstv %s136
    %v138 = vadd.s32 %v135, %v137
    %vm139 = vcmp.lt.s32.totalorder %v138, 8
    %140 = vset.pattern.permute.xlu0 0
    %141 = vperm.xlu0 %140, %v133
    %v142 = vpop.permute.xlu0 %141
    %vm143 = vcmp.eq.s32.totalorder %v138, %v142
    %vm144 = vmand %vm143, %vm139
    %vm145 = vmxor %vm144, 1
    %vm146 = vmand %vm145, %vm139
    %v147 = vld [vmem:[#allocation3] sm:$0xff]
    %v148 = vsel %vm144, %v130, 0.0
    %vm149 = vcmask 64512
    %v150 = vsel %vm149, %v148, 0.0
    %151 = vadd.xlane.f32.xlu0 %v150
    %v152 = vpop.xlane.xlu0 %151
    %v153 = vadd.f32 %v147, %v152
    %vm154 = vcmask 7168
    %155 = vst.msk [vmem:[#allocation3] sm:$0xff] %vm154, %v153
    %v156 = vadd.f32 %v130, 0.1
    %v157 = vmul.f32 %v156, 32.0
    %v158 = vmul.f32 %v157, 1.442695
    %v159 = vpow.pop %v158
    %v160 = vld [vmem:[#allocation4] sm:$0xff]
    %v161 = vsel %vm146, %v159, 0.0
    %v162 = vsel %vm149, %v161, 0.0
    %163 = vadd.xlane.f32.xlu0 %v162
    %v164 = vpop.xlane.xlu0 %163
    %v165 = vadd.f32 %v160, %v164
    %166 = vst.msk [vmem:[#allocation4] sm:$0xff] %vm154, %v165
    // Predicated region
    $region22: #{tpu_custom_call.1} parent=1 // pred_check
      %p167 = pneg %p30
    $region23: #{tpu_custom_call.1} parent=1 // pred_check_branch
      %169 = sbr.rel (%p167) target = $region25
    $region24: #{tpu_custom_call.1} parent=1 // pred_region
      %v170 = vlaneseq
      %v171 = vshrl.u32 %v170, 7
      %s172 = smul.u32 0, 8
      %v173 = vstv %s172
      %v174 = vadd.s32 %v171, %v173
      %vm175 = vcmp.lt.s32.totalorder %v174, 8
      %v176 = vld [vmem:[#allocation3] sm:$0xff]
      %v177 = vsub.f32 %v176, 0.1
      %v178 = vmul.f32 %v177, -32.0
      %v179 = vmul.f32 %v178, 1.442695
      %v180 = vpow.pop %v179
      %v181 = vsel %vm175, %v180, 0.0
      %v182 = vld [vmem:[#allocation4] sm:$0xff]
      %v183 = vsel %vm175, %v182, 0.0
      %v184 = vsel %vm154, %v181, 0.0
      %185 = vadd.xlane.f32.xlu0 %v184
      %v186 = vpop.xlane.xlu0 %185
      %v187 = vrot.slane %v186, 4
      %v188 = vadd.f32 %v186, %v187
      %v189 = vrot.slane %v188, 2
      %v190 = vadd.f32 %v188, %v189
      %v191 = vrot.slane %v190, 1
      %v192 = vadd.f32 %v190, %v191
      %s193 = vtos %v192
      %v194 = vstv %s193
      %195 = vst [vmem:[#allocation8] sm:$0xff] %v194
      %v196 = vsel %vm154, %v183, 0.0
      %197 = vadd.xlane.f32.xlu0 %v196
      %v198 = vpop.xlane.xlu0 %197
      %v199 = vrot.slane %v198, 4
      %v200 = vadd.f32 %v198, %v199
      %v201 = vrot.slane %v200, 2
      %v202 = vadd.f32 %v200, %v201
      %v203 = vrot.slane %v202, 1
      %v204 = vadd.f32 %v202, %v203
      %s205 = vtos %v204
      %v206 = vstv %s205
      %207 = vst [vmem:[#allocation9] sm:$0xff] %v206
    $region25: #{tpu_custom_call.1} parent=1 // pred_fallthru
      _
    // Predicated region
    $region26: #{tpu_custom_call.1} parent=1 // pred_check
      _
    $region27: #{tpu_custom_call.1} parent=1 // pred_check_branch
      %209 = sbr.rel (0) target = $region29
    $region28: #{tpu_custom_call.1} parent=1 // pred_region
      %s211 = ssub.s32 128, 128
      %212 = vsyncadd [#allocation7], %s211
      %s214 = sshll.u32 [#allocation8], 4
      %s215 = int_to_ptr.vmem [resolvable:$true] %s214
      %217 = dma.vmem_to_hbm [thread:$0]  %s215, 128, %s3, [#allocation7]
    $region29: #{tpu_custom_call.1} parent=1 // pred_fallthru
      _
    // Predicated region
    $region30: #{tpu_custom_call.1} parent=1 // pred_check
      _
    $region31: #{tpu_custom_call.1} parent=1 // pred_check_branch
      %219 = sbr.rel (0) target = $region33
    $region32: #{tpu_custom_call.1} parent=1 // pred_region
      %s221 = ssub.s32 128, 128
      %222 = vsyncadd [#allocation10], %s221
      %s224 = sshll.u32 [#allocation9], 4
      %s225 = int_to_ptr.vmem [resolvable:$true] %s224
      %227 = dma.vmem_to_hbm [thread:$0]  %s225, 128, %s4, [#allocation10]
    $region33: #{tpu_custom_call.1} parent=1 // pred_fallthru
      _
    // Predicated region
    $region34: #{tpu_custom_call.1} parent=1 // pred_check
      _
    $region35: #{tpu_custom_call.1} parent=1 // pred_check_branch
      %229 = sbr.rel (0) target = $region37
    $region36: #{tpu_custom_call.1} parent=1 // pred_region
      %230 = dma.done [#allocation7], 128
    $region37: #{tpu_custom_call.1} parent=1 // pred_fallthru
      _
    // Predicated region
    $region38: #{tpu_custom_call.1} parent=1 // pred_check
      _
    $region39: #{tpu_custom_call.1} parent=1 // pred_check_branch
      %232 = sbr.rel (0) target = $region41
    $region40: #{tpu_custom_call.1} parent=1 // pred_region
      %233 = dma.done [#allocation10], 128
    $region41: #{tpu_custom_call.1} parent=1 // pred_fallthru
      _
    %234 = vsyncpa [#allocation6], 1
    %235 = vsyncpa [#allocation7], 1
    %236 = vsyncpa [#allocation10], 1

</llo_original>
